<compile_context>
chip_gen: v5e
topology: v5e:2x2
jax: 0.10.0
libtpu: 0.0.40
codegen_flags: <defaults>
</compile_context>

<pallas_src>
import jax
import jax.numpy as jnp
from jax import lax
from jax.experimental import pallas as pl
from jax.experimental.pallas import tpu as pltpu


def _round_up(x, m):
    return (x + m - 1) // m * m


def _layernorm_kernel(x_ref, w_ref, b_ref, o_ref):
    # x_ref: (TILE_B, C, TILE_HW); each (b, hw) lane-column is normalized over
    # the C (sublane) axis.  Sums scaled by a precomputed 1/C constant; rsqrt
    # goes to the EUP slot (effectively free in this HBM-bound kernel).
    x = x_ref[...].astype(jnp.float32)                       # (TB, C, T)
    inv_c = jnp.float32(1.0 / x.shape[1])
    mu = jnp.sum(x, axis=1, keepdims=True) * inv_c           # (TB, 1, T)
    xc = x - mu
    var = jnp.sum(xc * xc, axis=1, keepdims=True) * inv_c    # biased (unbiased=False)
    inv = lax.rsqrt(var + jnp.float32(1e-5))
    w = w_ref[...].astype(jnp.float32)[None]                 # (1, C, 1)
    b = b_ref[...].astype(jnp.float32)[None]                 # (1, C, 1)
    o_ref[...] = (xc * inv * w + b).astype(o_ref.dtype)


def _chip_budgets():
    """(target input-tile bytes, scoped-VMEM cap) keyed off the TPU generation."""
    try:
        kind = jax.devices()[0].device_kind.lower()
    except Exception:
        kind = ""
    if "v7" in kind or "7x" in kind:
        # v7x: ~3.2 TB/s HBM per TC but only 64 MiB physical VMEM -> bigger
        # blocks (amortize the fixed step cost) under a 48 MiB scoped cap.
        return 6 << 20, 48 << 20
    # v5e / v6e: 2 MiB blocks already amortize the ~0.35 us step cost to <10%;
    # growing them further only adds VMEM pressure (esp. on v5e's 16 MiB default).
    return 2 << 20, 32 << 20


def layernorm_nchw(x_nchw, weight, bias):
    """Equivalent of LayerNorm(dim=C, bias=True, mu_sigma=False) on NCHW input."""
    B, C, H, W = x_nchw.shape
    HW = H * W
    x3 = x_nchw.reshape(B, C, HW)

    target_block_bytes, vmem_cap = _chip_budgets()
    itemsize = jnp.dtype(x3.dtype).itemsize
    packing = max(1, 4 // itemsize)
    padded_c = _round_up(C, 8 * packing)          # sublane padding of the VMEM tile

    # Resident bytes per block *element*: double-buffered in + out at the input
    # dtype plus ~3 block-sized f32 temporaries in the kernel body.
    bytes_per_elem = 4 * itemsize + 3 * 4
    max_elems = max(8 * 128, (vmem_cap - (4 << 20)) // bytes_per_elem)
    target_elems = min(max(8 * 128, target_block_bytes // itemsize), max_elems)

    # Lane-dense tile along H*W (multiple of 128).  No jnp.pad / output slice:
    # ragged final blocks are handled by Pallas (OOB columns read garbage but
    # are normalized independently and their writes are masked).
    cols = max(128, (target_elems // padded_c) // 128 * 128)
    if cols >= HW:
        # Whole feature map fits in one block: batch images along the leading
        # dim instead of emitting tiny, overhead-dominated blocks.
        tile_hw = HW
        per_image_elems = padded_c * _round_up(HW, 128)
        tile_b = max(1, min(B, target_elems // per_image_elems))
    else:
        tile_hw = cols
        tile_b = 1

    grid = (pl.cdiv(B, tile_b), pl.cdiv(HW, tile_hw))

    # Budget scoped VMEM from the actual block footprint (sublane/lane padded).
    n_block_elems = tile_b * padded_c * _round_up(tile_hw, 128)
    vmem_limit = int(min(vmem_cap,
                         max(16 << 20, n_block_elems * bytes_per_elem + (4 << 20))))

    w2 = weight.reshape(C, 1)
    b2 = bias.reshape(C, 1)

    y3 = pl.pallas_call(
        _layernorm_kernel,
        out_shape=jax.ShapeDtypeStruct((B, C, HW), x3.dtype),
        grid_spec=pltpu.PrefetchScalarGridSpec(
            num_scalar_prefetch=0,
            grid=grid,
            in_specs=[
                pl.BlockSpec((tile_b, C, tile_hw), lambda bi, ti: (bi, 0, ti)),
                pl.BlockSpec((C, 1), lambda bi, ti: (0, 0)),
                pl.BlockSpec((C, 1), lambda bi, ti: (0, 0)),
            ],
            out_specs=pl.BlockSpec((tile_b, C, tile_hw), lambda bi, ti: (bi, 0, ti)),
        ),
        compiler_params=pltpu.CompilerParams(
            # Fully data-parallel grid: Mosaic may split either axis across
            # v7x's two TensorCores; v5e/v6e (single TC) are unaffected.
            dimension_semantics=("parallel", "parallel"),
            vmem_limit_bytes=vmem_limit,
        ),
    )(x3, w2, b2)

    return y3.reshape(B, C, H, W)


if __name__ == "__main__":
    key = jax.random.PRNGKey(0)
    B, C, H, W = 2, 4, 16, 16
    x = jax.random.normal(key, (B, C, H, W), dtype=jnp.float32)

    # Deterministic parameter init per WithBias_LayerNorm.__init__
    weight = jnp.ones((C,), dtype=jnp.float32)
    bias = jnp.zeros((C,), dtype=jnp.float32)

    out = layernorm_nchw(x, weight, bias)
    out = jax.block_until_ready(out)

    # Reference (plain JAX, channel-axis norm on NCHW — identical to the
    # PyTorch b c h w -> b (h w) c + LayerNorm(dim=C) round-trip).
    mu = x.mean(axis=1, keepdims=True)
    var = ((x - mu) ** 2).mean(axis=1, keepdims=True)
    ref = (x - mu) / jnp.sqrt(var + 1e-5) * weight.reshape(1, C, 1, 1) + bias.reshape(1, C, 1, 1)

    assert out.shape == (B, C, H, W)
    assert jnp.allclose(out, ref, atol=1e-5, rtol=1e-5)

    print("KERNEL_OK")
</pallas_src>

<mosaic_0001>
module attributes {stable_mosaic.version = 11 : i64} {
  func.func @_layernorm_kernel(%arg0: i32, %arg1: i32, %arg2: memref<2x4x256xf32, #tpu.memory_space<vmem>>, %arg3: memref<4x1xf32, #tpu.memory_space<vmem>>, %arg4: memref<4x1xf32, #tpu.memory_space<vmem>>, %arg5: memref<2x4x256xf32, #tpu.memory_space<vmem>>) attributes {dimension_semantics = [#tpu.dimension_semantics<parallel>, #tpu.dimension_semantics<parallel>], iteration_bounds = array<i64: 1, 1>, scalar_prefetch = 0 : i64, scratch_operands = 0 : i64, tpu.core_type = #tpu.core_type<tc>, window_params = [{transform_indices = @transform_0, window_bounds = array<i64: 2, 4, 256>}, {pipeline_mode = #tpu.pipeline_mode<synchronous>, transform_indices = @transform_1, window_bounds = array<i64: 4, 1>}, {pipeline_mode = #tpu.pipeline_mode<synchronous>, transform_indices = @transform_2, window_bounds = array<i64: 4, 1>}, {transform_indices = @transform_3, window_bounds = array<i64: 2, 4, 256>}]} {
    %c0 = arith.constant 0 : index
    %c0_0 = arith.constant 0 : index
    %c0_1 = arith.constant 0 : index
    %0 = vector.load %arg2[%c0, %c0_0, %c0_1] : memref<2x4x256xf32, #tpu.memory_space<vmem>>, vector<2x4x256xf32>
    %cst = arith.constant dense<0.000000e+00> : vector<2x256xf32>
    %1 = vector.multi_reduction <add>, %0, %cst [1] : vector<2x4x256xf32> to vector<2x256xf32>
    %2 = vector.shape_cast %1 : vector<2x256xf32> to vector<2x1x256xf32>
    %cst_2 = arith.constant 2.500000e-01 : f32
    %3 = vector.broadcast %cst_2 : f32 to vector<2x1x256xf32>
    %4 = arith.mulf %2, %3 : vector<2x1x256xf32>
    %5 = vector.broadcast %4 : vector<2x1x256xf32> to vector<2x4x256xf32>
    %6 = arith.subf %0, %5 : vector<2x4x256xf32>
    %7 = arith.mulf %6, %6 : vector<2x4x256xf32>
    %cst_3 = arith.constant dense<0.000000e+00> : vector<2x256xf32>
    %8 = vector.multi_reduction <add>, %7, %cst_3 [1] : vector<2x4x256xf32> to vector<2x256xf32>
    %9 = vector.shape_cast %8 : vector<2x256xf32> to vector<2x1x256xf32>
    %cst_4 = arith.constant 2.500000e-01 : f32
    %10 = vector.broadcast %cst_4 : f32 to vector<2x1x256xf32>
    %11 = arith.mulf %9, %10 : vector<2x1x256xf32>
    %cst_5 = arith.constant 9.99999974E-6 : f32
    %12 = vector.broadcast %cst_5 : f32 to vector<2x1x256xf32>
    %13 = arith.addf %11, %12 : vector<2x1x256xf32>
    %14 = math.rsqrt %13 : vector<2x1x256xf32>
    %c0_6 = arith.constant 0 : index
    %c0_7 = arith.constant 0 : index
    %15 = vector.load %arg3[%c0_6, %c0_7] : memref<4x1xf32, #tpu.memory_space<vmem>>, vector<4x1xf32>
    %16 = vector.shape_cast %15 : vector<4x1xf32> to vector<1x4x1xf32>
    %c0_8 = arith.constant 0 : index
    %c0_9 = arith.constant 0 : index
    %17 = vector.load %arg4[%c0_8, %c0_9] : memref<4x1xf32, #tpu.memory_space<vmem>>, vector<4x1xf32>
    %18 = vector.shape_cast %17 : vector<4x1xf32> to vector<1x4x1xf32>
    %19 = vector.broadcast %14 : vector<2x1x256xf32> to vector<2x4x256xf32>
    %20 = arith.mulf %6, %19 : vector<2x4x256xf32>
    %21 = vector.broadcast %16 : vector<1x4x1xf32> to vector<2x4x256xf32>
    %22 = arith.mulf %20, %21 : vector<2x4x256xf32>
    %23 = vector.broadcast %18 : vector<1x4x1xf32> to vector<2x4x256xf32>
    %24 = arith.addf %22, %23 : vector<2x4x256xf32>
    %c0_10 = arith.constant 0 : index
    %c0_11 = arith.constant 0 : index
    %c0_12 = arith.constant 0 : index
    %25 = vector.load %arg5[%c0_10, %c0_11, %c0_12] : memref<2x4x256xf32, #tpu.memory_space<vmem>>, vector<2x4x256xf32>
    tpu.vector_store %arg5[%c0_10, %c0_11, %c0_12], %24 {strides = array<i32>} : memref<2x4x256xf32, #tpu.memory_space<vmem>>, vector<2x4x256xf32>,
    return
  }
  func.func @transform_0(%arg0: i32, %arg1: i32) -> (i32, i32, i32) {
    %c0_i32 = arith.constant 0 : i32
    %c0_i32_0 = arith.constant 0 : i32
    return %arg0, %c0_i32, %arg1 : i32, i32, i32
  }
  func.func @transform_1(%arg0: i32, %arg1: i32) -> (i32, i32) {
    %c0_i32 = arith.constant 0 : i32
    %c0_i32_0 = arith.constant 0 : i32
    %c0_i32_1 = arith.constant 0 : i32
    return %c0_i32, %c0_i32_0 : i32, i32
  }
  func.func @transform_2(%arg0: i32, %arg1: i32) -> (i32, i32) {
    %c0_i32 = arith.constant 0 : i32
    %c0_i32_0 = arith.constant 0 : i32
    %c0_i32_1 = arith.constant 0 : i32
    return %c0_i32, %c0_i32_0 : i32, i32
  }
  func.func @transform_3(%arg0: i32, %arg1: i32) -> (i32, i32, i32) {
    %c0_i32 = arith.constant 0 : i32
    %c0_i32_0 = arith.constant 0 : i32
    return %arg0, %c0_i32, %arg1 : i32, i32, i32
  }
}

</mosaic_0001>

<llo_original>
// kernel: tpu_custom_call.1
$region0: #{tpu_custom_call.1}
  #allocation0 [shape = 'u32[]', space=smem, size = 0x4, offset = 0x4, fixed_abs, tag = 'smem constant byte address 0x4 - core index']
  #allocation1 [shape = 'u32[72,128]{1,0:T(1,128)}', space=vmem, size = 0x9000, scoped, tag = 'internal scratch']
  %s0 = inlined_call_operand.hbm [shape: f32[2,4,256], index: 0, kind: input, shape index: {}]
  %s1 = inlined_call_operand.vmem [shape: f32[4,1], index: 1, kind: input, shape index: {}]
  %s2 = inlined_call_operand.vmem [shape: f32[4,1], index: 2, kind: input, shape index: {}]
  %s3 = inlined_call_operand.hbm [shape: f32[2,4,256], index: 3, kind: output, shape index: {}]
  %s4 = sld [smem:[#allocation0]]
  $region26: #{tpu_custom_call.1} parent=0
    _
  %s6 = ssub.s32 1, %s4
  %s7 = scalar_select 0, %s6, %s4
  $region1: #{tpu_custom_call.1} parent=0
    #allocation2 [shape = 'u8[8192]{0}', space=vmem, size = 0x2000, scoped, tag = 'input window, operand 0, single buffered']
    #allocation3 [shape = 's32[1]{0}', space=sflag, size = 0x4, scoped, tag = 'scoped memory for tpu_custom_call.1']
    #allocation4 [shape = 's32[1]{0}', space=sflag, size = 0x4, scoped, tag = 'scoped memory for tpu_custom_call.1']
    #allocation5 [shape = 'u8[8192]{0}', space=vmem, size = 0x2000, scoped, tag = 'output window, operand 0, single buffered']
    %8 = vsyncpa [#allocation3], 0
    %9 = vsyncpa [#allocation4], 0
    // Predicated region
    $region2: #{tpu_custom_call.1} parent=1 // pred_check
      _
    $region3: #{tpu_custom_call.1} parent=1 // pred_check_branch
      %11 = sbr.rel (0) target = $region5
    $region4: #{tpu_custom_call.1} parent=1 // pred_region
      %13 = vsyncadd [#allocation3], 0
      %s14 = sshll.u32 %s0, 4
      %s15 = int_to_ptr.hbm [resolvable:$true] %s14
      %s16 = sshll.u32 [#allocation2], 4
      %s17 = int_to_ptr.vmem [resolvable:$true] %s16
      %22 = dma.hbm_to_vmem [thread:$0]  %s15, 256, %s17, [#allocation3], 128, 128, 8
    $region5: #{tpu_custom_call.1} parent=1 // pred_fallthru
      _
    // Predicated region
    $region6: #{tpu_custom_call.1} parent=1 // pred_check
      _
    $region7: #{tpu_custom_call.1} parent=1 // pred_check_branch
      %24 = sbr.rel (0) target = $region9
    $region8: #{tpu_custom_call.1} parent=1 // pred_region
      _
    $region9: #{tpu_custom_call.1} parent=1 // pred_fallthru
      _
    // Predicated region
    $region10: #{tpu_custom_call.1} parent=1 // pred_check
      _
    $region11: #{tpu_custom_call.1} parent=1 // pred_check_branch
      %26 = sbr.rel (0) target = $region13
    $region12: #{tpu_custom_call.1} parent=1 // pred_region
      _
    $region13: #{tpu_custom_call.1} parent=1 // pred_fallthru
      _
    // Predicated region
    $region14: #{tpu_custom_call.1} parent=1 // pred_check
      _
    $region15: #{tpu_custom_call.1} parent=1 // pred_check_branch
      %28 = sbr.rel (0) target = $region17
    $region16: #{tpu_custom_call.1} parent=1 // pred_region
      %30 = dma.done [#allocation3], 256
    $region17: #{tpu_custom_call.1} parent=1 // pred_fallthru
      _
    %v31 = vld [vmem:[#allocation2] sm:$0xff]
    %v32 = vld [vmem:[#allocation2 + $0x8] sm:$0xff]
    %35 = vst [vmem:[#allocation1] ss:$2 sm:$0xff] %v31
    %v36 = vld.sshfl [vmem:[#allocation1] sm:$0xff pattern:$0x75316420]
    %v37 = vld.sshfl [vmem:[#allocation1 + $0x8] sm:$0xff pattern:$0x75316420]
    %s38 = scalar_lea.vmem [#allocation1], 16
    %39 = vst [vmem:[%s38] ss:$2 sm:$0xff] %v32
    %v40 = vld.sshfl [vmem:[#allocation1 + $0x10] sm:$0xff pattern:$0x75316420]
    %v41 = vld.sshfl [vmem:[#allocation1 + $0x18] sm:$0xff pattern:$0x75316420]
    %vm46 = vcmask 1043456
    %v47 = vsel %vm46, %v36, 0.0
    %v48 = vrot.slane %v47, 4
    %v49 = vadd.f32 %v47, %v48
    %v50 = vrot.slane %v49, 2
    %v51 = vadd.f32 %v49, %v50
    %v52 = vrot.slane %v51, 1
    %v53 = vadd.f32 %v51, %v52
    %v54 = vsel %vm46, %v37, 0.0
    %v55 = vrot.slane %v54, 4
    %v56 = vadd.f32 %v54, %v55
    %v57 = vrot.slane %v56, 2
    %v58 = vadd.f32 %v56, %v57
    %v59 = vrot.slane %v58, 1
    %v60 = vadd.f32 %v58, %v59
    %v61 = vsel %vm46, %v40, 0.0
    %v62 = vrot.slane %v61, 4
    %v63 = vadd.f32 %v61, %v62
    %v64 = vrot.slane %v63, 2
    %v65 = vadd.f32 %v63, %v64
    %v66 = vrot.slane %v65, 1
    %v67 = vadd.f32 %v65, %v66
    %v68 = vsel %vm46, %v41, 0.0
    %v69 = vrot.slane %v68, 4
    %v70 = vadd.f32 %v68, %v69
    %v71 = vrot.slane %v70, 2
    %v72 = vadd.f32 %v70, %v71
    %v73 = vrot.slane %v72, 1
    %v74 = vadd.f32 %v72, %v73
    %v75 = vmul.f32 %v53, 0.25
    %v76 = vmul.f32 %v60, 0.25
    %v77 = vmul.f32 %v67, 0.25
    %v78 = vmul.f32 %v74, 0.25
    %v83 = vrot.slane %v76, 4
    %v84 = vrot.slane %v78, 4
    %v85 = vsel %vm46, %v75, %v83
    %v86 = vsel %vm46, %v77, %v84
    %v89 = vsub.f32 %v31, %v85
    %v90 = vsub.f32 %v32, %v86
    %v91 = vmul.f32 %v89, %v89
    %v92 = vmul.f32 %v90, %v90
    %95 = vst [vmem:[#allocation1] ss:$2 sm:$0xff] %v91
    %v96 = vld.sshfl [vmem:[#allocation1] sm:$0xff pattern:$0x75316420]
    %v97 = vld.sshfl [vmem:[#allocation1 + $0x8] sm:$0xff pattern:$0x75316420]
    %s98 = scalar_lea.vmem [#allocation1], 16
    %99 = vst [vmem:[%s98] ss:$2 sm:$0xff] %v92
    %v100 = vld.sshfl [vmem:[#allocation1 + $0x10] sm:$0xff pattern:$0x75316420]
    %v101 = vld.sshfl [vmem:[#allocation1 + $0x18] sm:$0xff pattern:$0x75316420]
    %v106 = vsel %vm46, %v96, 0.0
    %v107 = vrot.slane %v106, 4
    %v108 = vadd.f32 %v106, %v107
    %v109 = vrot.slane %v108, 2
    %v110 = vadd.f32 %v108, %v109
    %v111 = vrot.slane %v110, 1
    %v112 = vadd.f32 %v110, %v111
    %v113 = vsel %vm46, %v97, 0.0
    %v114 = vrot.slane %v113, 4
    %v115 = vadd.f32 %v113, %v114
    %v116 = vrot.slane %v115, 2
    %v117 = vadd.f32 %v115, %v116
    %v118 = vrot.slane %v117, 1
    %v119 = vadd.f32 %v117, %v118
    %v120 = vsel %vm46, %v100, 0.0
    %v121 = vrot.slane %v120, 4
    %v122 = vadd.f32 %v120, %v121
    %v123 = vrot.slane %v122, 2
    %v124 = vadd.f32 %v122, %v123
    %v125 = vrot.slane %v124, 1
    %v126 = vadd.f32 %v124, %v125
    %v127 = vsel %vm46, %v101, 0.0
    %v128 = vrot.slane %v127, 4
    %v129 = vadd.f32 %v127, %v128
    %v130 = vrot.slane %v129, 2
    %v131 = vadd.f32 %v129, %v130
    %v132 = vrot.slane %v131, 1
    %v133 = vadd.f32 %v131, %v132
    %v134 = vmul.f32 %v112, 0.25
    %v135 = vmul.f32 %v119, 0.25
    %v136 = vmul.f32 %v126, 0.25
    %v137 = vmul.f32 %v133, 0.25
    %v138 = vadd.f32 %v134, 1e-05
    %v139 = vadd.f32 %v135, 1e-05
    %v140 = vadd.f32 %v136, 1e-05
    %v141 = vadd.f32 %v137, 1e-05
    %v142 = vrsqrt.pop %v138
    %v143 = vmul.f32 %v142, %v138
    %v144 = vmul.f32 %v143, %v142
    %v145 = vmul.f32 0.5, %v144
    %v146 = vsub.f32 1.5, %v145
    %v147 = vmul.f32 %v142, %v146
    %vm148 = vweird.f32 %v138
    %vm149 = vweird.f32 %v142
    %vm150 = vmor %vm148, %vm149
    %v151 = vsel %vm150, %v142, %v147
    %v152 = vrsqrt.pop %v139
    %v153 = vmul.f32 %v152, %v139
    %v154 = vmul.f32 %v153, %v152
    %v155 = vmul.f32 0.5, %v154
    %v156 = vsub.f32 1.5, %v155
    %v157 = vmul.f32 %v152, %v156
    %vm158 = vweird.f32 %v139
    %vm159 = vweird.f32 %v152
    %vm160 = vmor %vm158, %vm159
    %v161 = vsel %vm160, %v152, %v157
    %v162 = vrsqrt.pop %v140
    %v163 = vmul.f32 %v162, %v140
    %v164 = vmul.f32 %v163, %v162
    %v165 = vmul.f32 0.5, %v164
    %v166 = vsub.f32 1.5, %v165
    %v167 = vmul.f32 %v162, %v166
    %vm168 = vweird.f32 %v140
    %vm169 = vweird.f32 %v162
    %vm170 = vmor %vm168, %vm169
    %v171 = vsel %vm170, %v162, %v167
    %v172 = vrsqrt.pop %v141
    %v173 = vmul.f32 %v172, %v141
    %v174 = vmul.f32 %v173, %v172
    %v175 = vmul.f32 0.5, %v174
    %v176 = vsub.f32 1.5, %v175
    %v177 = vmul.f32 %v172, %v176
    %vm178 = vweird.f32 %v141
    %vm179 = vweird.f32 %v172
    %vm180 = vmor %vm178, %vm179
    %v181 = vsel %vm180, %v172, %v177
    %v182 = vld [vmem:[%s1] sm:$0xf]
    %v183 = vld [vmem:[%s2] sm:$0xf]
    %v188 = vrot.slane %v161, 4
    %v189 = vrot.slane %v181, 4
    %v190 = vsel %vm46, %v151, %v188
    %v191 = vsel %vm46, %v171, %v189
    %v194 = vmul.f32 %v89, %v190
    %v195 = vmul.f32 %v90, %v191
    %197 = vset.pattern.permute.xlu0 0
    %198 = vperm.xlu0 %197, %v182
    %v199 = vpop.permute.xlu0 %198
    %v201 = vunpack.c.l.s4 839922192
    %v202 = vunpack.c.0.s8 %v201
    %v203 = vperm.slane %v199, %v202
    %v205 = vmul.f32 %v194, %v203
    %v206 = vmul.f32 %v195, %v203
    %208 = vset.pattern.permute.xlu0 0
    %209 = vperm.xlu0 %208, %v183
    %v210 = vpop.permute.xlu0 %209
    %v212 = vunpack.c.l.s4 839922192
    %v213 = vunpack.c.0.s8 %v212
    %v214 = vperm.slane %v210, %v213
    %v216 = vadd.f32 %v205, %v214
    %v217 = vadd.f32 %v206, %v214
    %218 = vst [vmem:[#allocation5] sm:$0xff] %v216
    %219 = vst [vmem:[#allocation5 + $0x8] sm:$0xff] %v217
    // Predicated region
    $region18: #{tpu_custom_call.1} parent=1 // pred_check
      _
    $region19: #{tpu_custom_call.1} parent=1 // pred_check_branch
      %221 = sbr.rel (0) target = $region21
    $region20: #{tpu_custom_call.1} parent=1 // pred_region
      %223 = vsyncadd [#allocation4], 0
      %s224 = sshll.u32 [#allocation5], 4
      %s225 = int_to_ptr.vmem [resolvable:$true] %s224
      %s226 = sshll.u32 %s3, 4
      %s227 = int_to_ptr.hbm [resolvable:$true] %s226
      %232 = dma.vmem_to_hbm [thread:$0]  %s225, 256, %s227, [#allocation4], 128, 128, 8
    $region21: #{tpu_custom_call.1} parent=1 // pred_fallthru
      _
    // Predicated region
    $region22: #{tpu_custom_call.1} parent=1 // pred_check
      _
    $region23: #{tpu_custom_call.1} parent=1 // pred_check_branch
      %234 = sbr.rel (0) target = $region25
    $region24: #{tpu_custom_call.1} parent=1 // pred_region
      %236 = dma.done [#allocation4], 256
    $region25: #{tpu_custom_call.1} parent=1 // pred_fallthru
      _
    %237 = vsyncpa [#allocation3], 1
    %238 = vsyncpa [#allocation4], 1

</llo_original>
